<compile_context>
chip_gen: v7x
topology: tpu7x:2x2x1
jax: 0.10.0
libtpu: 0.0.40
codegen_flags: <defaults>
</compile_context>

<pallas_src>
import math

import jax
import jax.numpy as jnp
from jax import lax
from jax.experimental import pallas as pl
from jax.experimental.pallas import tpu as pltpu


def _round_up(v, m):
    return (v + m - 1) // m * m


def _gelu_exact(x):
    # nn.GELU() default is the exact erf formulation.
    return 0.5 * x * (1.0 + lax.erf(x * (1.0 / math.sqrt(2.0))))


def _gelu_tanh(x):
    # Optional tanh approximation (routes through the EUP instead of a long
    # VALU polynomial); numerics differ slightly from nn.GELU() -> opt-in.
    c = math.sqrt(2.0 / math.pi)
    return 0.5 * x * (1.0 + jnp.tanh(c * (x + 0.044715 * x * x * x)))


def _vmem_capacity_bytes():
    """Best-effort per-core VMEM capacity; conservative v7x default on failure."""
    try:
        info = pltpu.get_tpu_info()
        for name in ("vmem_capacity_bytes", "vmem_size_bytes", "vmem_bytes"):
            v = getattr(info, name, None)
            if v:
                return int(v)
    except Exception:
        pass
    return 64 * 2**20


def _mlp_body(x, w1, b1, w2, gelu_fn):
    # fc1 (f32 accumulate on the MXU), bias, GELU, fc2 partial (f32 accumulate).
    h = jnp.dot(x, w1, preferred_element_type=jnp.float32)
    h = gelu_fn(h + b1.astype(jnp.float32))
    return jnp.dot(h.astype(w2.dtype), w2, preferred_element_type=jnp.float32)


def _make_single_h_kernel(gelu_fn):
    # Hidden dim fits in one tile: no scratch accumulator, no init/finalize.
    def kernel(x_ref, w1_ref, b1_ref, w2_ref, b2_ref, o_ref):
        out = _mlp_body(x_ref[...], w1_ref[...], b1_ref[...], w2_ref[...], gelu_fn)
        o_ref[...] = (out + b2_ref[...].astype(jnp.float32)).astype(o_ref.dtype)

    return kernel


def _make_tiled_h_kernel(gelu_fn, resident):
    # Hidden axis tiled (grid axis 1, "arbitrary"); f32 VMEM accumulator is
    # resident across it. fc2 bias is folded into the accumulator init.
    def kernel(x_ref, w1_ref, b1_ref, w2_ref, b2_ref, o_ref, acc_ref):
        k = pl.program_id(1)

        @pl.when(k == 0)
        def _init():
            acc_ref[...] = jnp.broadcast_to(
                b2_ref[...].astype(jnp.float32), acc_ref.shape)

        if resident:
            # Whole weight set lives in VMEM; pick the k-th hidden slab via a
            # leading-axis dynamic index (no HBM re-streaming per row tile).
            w1_blk = w1_ref[k]      # (Cin_p, th)
            b1_blk = b1_ref[k]      # (1, th)
            w2_blk = w2_ref[k]      # (th, Cout_p)
        else:
            # Streamed weight slabs delivered by the BlockSpec pipeline.
            w1_blk = w1_ref[...]
            b1_blk = b1_ref[...]
            w2_blk = w2_ref[...]

        acc_ref[...] += _mlp_body(x_ref[...], w1_blk, b1_blk, w2_blk, gelu_fn)

        @pl.when(k == pl.num_programs(1) - 1)
        def _finalize():
            o_ref[...] = acc_ref[...].astype(o_ref.dtype)

    return kernel


def mlp_pallas(x, w1, b1, w2, b2, *, tm=None, th=None,
               resident_weights=None, approx_gelu=False):
    """x: (B, N, C_in) -> (B, N, C_out).

    Weights are stored as (in, out) so the kernel computes x @ w + b
    (PyTorch's nn.Linear weight is (out, in); transpose when porting weights).
    For best perf on v5e, pass bf16 weights/activations when acceptable.
    """
    B, N, C_in = x.shape
    Cin_w, H = w1.shape
    Hw, C_out = w2.shape
    assert Cin_w == C_in and Hw == H

    M = B * N
    x_it = jnp.dtype(x.dtype).itemsize
    w_it = jnp.dtype(w1.dtype).itemsize

    # Sublane packing of the row dim: 8 (f32), 16 (bf16), 32 (int8/fp8).
    sub = max(8, 32 // x_it)

    # ---- lane / MXU padding of channel dims (zero padding is exact here:
    # gelu(0)=0 and zero weight rows/cols contribute nothing; padded output
    # columns are sliced off). Hidden padded to 256 for full MXU width. -------
    Cin_p = _round_up(C_in, 128)
    Cout_p = _round_up(C_out, 128)
    Hp = _round_up(H, 256)
    if th is not None:
        th = _round_up(th, 256)
        Hp = _round_up(Hp, th)

    # ---- tile selection ------------------------------------------------------
    if tm is None:
        # Big row tiles raise the weight-stream arithmetic intensity above the
        # MXU/HBM breakeven on v6e/v7x; tiny problems collapse to one tile.
        tm = 1024 if M >= 1024 else _round_up(M, sub)
    else:
        tm = _round_up(tm, sub)

    if th is None:
        th = 256
        for cand in (2048, 1024, 512, 256):
            if Hp % cand == 0:
                th = cand
                break

    vmem_cap = _vmem_capacity_bytes()
    budget = int(0.85 * vmem_cap)

    # Budget resident weights as if double-buffered (conservative).
    wbytes_resident = 2 * (Cin_p * Hp + Hp * Cout_p) * w_it
    if resident_weights is None:
        resident_weights = wbytes_resident <= int(0.45 * vmem_cap)

    def footprint(tm_, th_, resident_):
        f = 2 * tm_ * Cin_p * x_it            # x row tiles (double-buffered)
        f += 2 * tm_ * Cout_p * x_it          # output tiles
        if Hp // th_ > 1:
            f += tm_ * Cout_p * 4             # f32 accumulator scratch
        f += 2 * tm_ * th_ * 4                # fc1/GELU f32 intermediate headroom
        if resident_:
            f += wbytes_resident
        else:
            f += 2 * (Cin_p * th_ + th_ * Cout_p) * w_it
        f += 2 * (Hp + Cout_p) * w_it         # biases
        return f

    # Shrink th, then drop residency, then shrink tm until the tiles fit.
    while (footprint(tm, th, resident_weights) > budget
           and th >= 512 and (th // 2) % 256 == 0):
        th //= 2
    if footprint(tm, th, resident_weights) > budget:
        resident_weights = False
    while footprint(tm, th, resident_weights) > budget and tm > 256:
        tm = _round_up(tm // 2, sub)

    grid_h = Hp // th
    single_h = grid_h == 1

    Mp = _round_up(M, tm)
    grid_m = Mp // tm
    # NOTE: no even-grid_m padding -- on single-TC v5e/v6e an extra padded row
    # tile is pure wasted compute; on v7x the residual imbalance is small.

    # ---- wrapper-side layout plumbing ---------------------------------------
    x2 = jnp.pad(x.reshape(M, C_in), ((0, Mp - M), (0, Cin_p - C_in)))
    w1p = jnp.pad(w1, ((0, Cin_p - C_in), (0, Hp - H)))
    b1p = jnp.pad(b1.reshape(1, H), ((0, 0), (0, Hp - H)))
    w2p = jnp.pad(w2, ((0, Hp - H), (0, Cout_p - C_out)))
    b2p = jnp.pad(b2.reshape(1, C_out), ((0, 0), (0, Cout_p - C_out)))

    gelu_fn = _gelu_tanh if approx_gelu else _gelu_exact

    x_spec = pl.BlockSpec((tm, Cin_p), lambda i, k: (i, 0))
    b2_spec = pl.BlockSpec((1, Cout_p), lambda i, k: (0, 0))
    out_spec = pl.BlockSpec((tm, Cout_p), lambda i, k: (i, 0))

    if single_h:
        w1_arg, b1_arg, w2_arg = w1p, b1p, w2p
        w1_spec = pl.BlockSpec((Cin_p, Hp), lambda i, k: (0, 0))
        b1_spec = pl.BlockSpec((1, Hp), lambda i, k: (0, 0))
        w2_spec = pl.BlockSpec((Hp, Cout_p), lambda i, k: (0, 0))
        kernel = _make_single_h_kernel(gelu_fn)
        scratch = []
    elif resident_weights:
        # Hoist the hidden-slab axis to a leading block axis (one-time XLA
        # transpose/reshape in the wrapper); the whole weight set then stays
        # resident in VMEM for every row tile.
        w1_arg = w1p.reshape(Cin_p, grid_h, th).transpose(1, 0, 2)
        b1_arg = b1p.reshape(grid_h, 1, th)
        w2_arg = w2p.reshape(grid_h, th, Cout_p)
        w1_spec = pl.BlockSpec((grid_h, Cin_p, th), lambda i, k: (0, 0, 0))
        b1_spec = pl.BlockSpec((grid_h, 1, th), lambda i, k: (0, 0, 0))
        w2_spec = pl.BlockSpec((grid_h, th, Cout_p), lambda i, k: (0, 0, 0))
        kernel = _make_tiled_h_kernel(gelu_fn, resident=True)
        scratch = [pltpu.VMEM((tm, Cout_p), jnp.float32)]
    else:
        w1_arg, b1_arg, w2_arg = w1p, b1p, w2p
        w1_spec = pl.BlockSpec((Cin_p, th), lambda i, k: (0, k))
        b1_spec = pl.BlockSpec((1, th), lambda i, k: (0, k))
        w2_spec = pl.BlockSpec((th, Cout_p), lambda i, k: (k, 0))
        kernel = _make_tiled_h_kernel(gelu_fn, resident=False)
        scratch = [pltpu.VMEM((tm, Cout_p), jnp.float32)]

    vmem_limit = int(min(max(footprint(tm, th, resident_weights) * 5 // 4,
                             32 * 2**20), budget))

    out = pl.pallas_call(
        kernel,
        out_shape=jax.ShapeDtypeStruct((Mp, Cout_p), x.dtype),
        grid_spec=pltpu.PrefetchScalarGridSpec(
            num_scalar_prefetch=0,
            grid=(grid_m, grid_h),              # reduction (hidden) axis last
            in_specs=[x_spec, w1_spec, b1_spec, w2_spec, b2_spec],
            out_specs=out_spec,
            scratch_shapes=scratch,
        ),
        compiler_params=pltpu.CompilerParams(
            dimension_semantics=("parallel", "arbitrary"),
            vmem_limit_bytes=vmem_limit,
        ),
    )(x2, w1_arg, b1_arg, w2_arg, b2p)

    return out[:M, :C_out].reshape(B, N, C_out)


def mlp_reference(x, w1, b1, w2, b2):
    h = jnp.einsum("bnc,ch->bnh", x, w1, precision=lax.Precision.HIGHEST) + b1
    h = _gelu_exact(h)
    return jnp.einsum("bnh,ho->bno", h, w2, precision=lax.Precision.HIGHEST) + b2


def init_linear(key, fan_in, fan_out, dtype=jnp.float32):
    # Deterministic init mimicking torch.nn.Linear (uniform +/- 1/sqrt(fan_in)).
    kw, kb = jax.random.split(key)
    bound = 1.0 / math.sqrt(fan_in)
    # stored as (in, out) so the kernel does x @ w
    w = jax.random.uniform(kw, (fan_in, fan_out), dtype, -bound, bound)
    b = jax.random.uniform(kb, (fan_out,), dtype, -bound, bound)
    return w, b


def _run_case(B, N, c_in, hidden, c_out, key, **kw):
    kx, k1, k2 = jax.random.split(key, 3)
    x = jax.random.normal(kx, (B, N, c_in), jnp.float32)
    w1, b1 = init_linear(k1, c_in, hidden)
    w2, b2 = init_linear(k2, hidden, c_out)
    y = jax.block_until_ready(mlp_pallas(x, w1, b1, w2, b2, **kw))
    y_ref = mlp_reference(x, w1, b1, w2, b2)
    assert y.shape == (B, N, c_out)
    return y, y_ref


if __name__ == "__main__":
    key = jax.random.PRNGKey(0)
    k0, k1, k2 = jax.random.split(key, 3)

    # 1) Module-default small shapes: single hidden tile, no scratch accumulator.
    y, y_ref = _run_case(2, 8, 16, 32, 16, k0)
    assert jnp.allclose(y, y_ref, atol=1e-4, rtol=1e-4), "case1 mismatch"

    # 2) Hidden-tiled path with VMEM-resident weights (grid_h=2).
    y, y_ref = _run_case(2, 16, 64, 512, 64, k1, th=256, resident_weights=True)
    assert jnp.allclose(y, y_ref, atol=1e-3, rtol=1e-3), "case2 mismatch"

    # 3) Hidden-tiled path with streamed weight slabs (grid_h=2).
    y, y_ref = _run_case(2, 16, 64, 512, 64, k2, th=256, resident_weights=False)
    assert jnp.allclose(y, y_ref, atol=1e-3, rtol=1e-3), "case3 mismatch"

    print("KERNEL_OK")
</pallas_src>

<mosaic_0001>
module attributes {stable_mosaic.version = 11 : i64} {
  func.func @kernel(%arg0: i32, %arg1: i32, %arg2: memref<16x128xf32, #tpu.memory_space<vmem>>, %arg3: memref<128x256xf32, #tpu.memory_space<vmem>>, %arg4: memref<1x256xf32, #tpu.memory_space<vmem>>, %arg5: memref<256x128xf32, #tpu.memory_space<vmem>>, %arg6: memref<1x128xf32, #tpu.memory_space<vmem>>, %arg7: memref<16x128xf32, #tpu.memory_space<vmem>>) attributes {dimension_semantics = [#tpu.dimension_semantics<parallel>, #tpu.dimension_semantics<arbitrary>], iteration_bounds = array<i64: 1, 1>, scalar_prefetch = 0 : i64, scratch_operands = 0 : i64, tpu.core_type = #tpu.core_type<tc>, window_params = [{transform_indices = @transform_0, window_bounds = array<i64: 16, 128>}, {pipeline_mode = #tpu.pipeline_mode<synchronous>, transform_indices = @transform_1, window_bounds = array<i64: 128, 256>}, {pipeline_mode = #tpu.pipeline_mode<synchronous>, transform_indices = @transform_2, window_bounds = array<i64: 1, 256>}, {pipeline_mode = #tpu.pipeline_mode<synchronous>, transform_indices = @transform_3, window_bounds = array<i64: 256, 128>}, {pipeline_mode = #tpu.pipeline_mode<synchronous>, transform_indices = @transform_4, window_bounds = array<i64: 1, 128>}, {transform_indices = @transform_5, window_bounds = array<i64: 16, 128>}]} {
    %c0 = arith.constant 0 : index
    %c0_0 = arith.constant 0 : index
    %0 = vector.load %arg2[%c0, %c0_0] : memref<16x128xf32, #tpu.memory_space<vmem>>, vector<16x128xf32>
    %c0_1 = arith.constant 0 : index
    %c0_2 = arith.constant 0 : index
    %1 = vector.load %arg3[%c0_1, %c0_2] : memref<128x256xf32, #tpu.memory_space<vmem>>, vector<128x256xf32>
    %c0_3 = arith.constant 0 : index
    %c0_4 = arith.constant 0 : index
    %2 = vector.load %arg4[%c0_3, %c0_4] : memref<1x256xf32, #tpu.memory_space<vmem>>, vector<1x256xf32>
    %c0_5 = arith.constant 0 : index
    %c0_6 = arith.constant 0 : index
    %3 = vector.load %arg5[%c0_5, %c0_6] : memref<256x128xf32, #tpu.memory_space<vmem>>, vector<256x128xf32>
    %cst = arith.constant dense<0.000000e+00> : vector<16x256xf32>
    %4 = tpu.matmul %0, %1, %cst {dimension_numbers = #tpu.dot_dimension_numbers<[1], [0], [0], [1], [0, 0, 1, 1], [], []>} : vector<16x128xf32>, vector<128x256xf32>, vector<16x256xf32> -> vector<16x256xf32>
    %5 = vector.broadcast %2 : vector<1x256xf32> to vector<16x256xf32>
    %6 = arith.addf %4, %5 : vector<16x256xf32>
    %cst_7 = arith.constant 5.000000e-01 : f32
    %7 = vector.broadcast %cst_7 : f32 to vector<16x256xf32>
    %8 = arith.mulf %7, %6 : vector<16x256xf32>
    %cst_8 = arith.constant 0.707106769 : f32
    %9 = vector.broadcast %cst_8 : f32 to vector<16x256xf32>
    %10 = arith.mulf %6, %9 : vector<16x256xf32>
    %11 = math.erf %10 : vector<16x256xf32>
    %cst_9 = arith.constant 1.000000e+00 : f32
    %12 = vector.broadcast %cst_9 : f32 to vector<16x256xf32>
    %13 = arith.addf %12, %11 : vector<16x256xf32>
    %14 = arith.mulf %8, %13 : vector<16x256xf32>
    %cst_10 = arith.constant dense<0.000000e+00> : vector<16x128xf32>
    %15 = tpu.matmul %14, %3, %cst_10 {dimension_numbers = #tpu.dot_dimension_numbers<[1], [0], [0], [1], [0, 0, 1, 1], [], []>} : vector<16x256xf32>, vector<256x128xf32>, vector<16x128xf32> -> vector<16x128xf32>
    %c0_11 = arith.constant 0 : index
    %c0_12 = arith.constant 0 : index
    %16 = vector.load %arg6[%c0_11, %c0_12] : memref<1x128xf32, #tpu.memory_space<vmem>>, vector<1x128xf32>
    %17 = vector.broadcast %16 : vector<1x128xf32> to vector<16x128xf32>
    %18 = arith.addf %15, %17 : vector<16x128xf32>
    %c0_13 = arith.constant 0 : index
    %c0_14 = arith.constant 0 : index
    %19 = vector.load %arg7[%c0_13, %c0_14] : memref<16x128xf32, #tpu.memory_space<vmem>>, vector<16x128xf32>
    tpu.vector_store %arg7[%c0_13, %c0_14], %18 {strides = array<i32>} : memref<16x128xf32, #tpu.memory_space<vmem>>, vector<16x128xf32>,
    return
  }
  func.func @transform_0(%arg0: i32, %arg1: i32) -> (i32, i32) {
    %c0_i32 = arith.constant 0 : i32
    %c0_i32_0 = arith.constant 0 : i32
    return %arg0, %c0_i32 : i32, i32
  }
  func.func @transform_1(%arg0: i32, %arg1: i32) -> (i32, i32) {
    %c0_i32 = arith.constant 0 : i32
    %c0_i32_0 = arith.constant 0 : i32
    %c0_i32_1 = arith.constant 0 : i32
    return %c0_i32, %c0_i32_0 : i32, i32
  }
  func.func @transform_2(%arg0: i32, %arg1: i32) -> (i32, i32) {
    %c0_i32 = arith.constant 0 : i32
    %c0_i32_0 = arith.constant 0 : i32
    %c0_i32_1 = arith.constant 0 : i32
    return %c0_i32, %c0_i32_0 : i32, i32
  }
  func.func @transform_3(%arg0: i32, %arg1: i32) -> (i32, i32) {
    %c0_i32 = arith.constant 0 : i32
    %c0_i32_0 = arith.constant 0 : i32
    %c0_i32_1 = arith.constant 0 : i32
    return %c0_i32, %c0_i32_0 : i32, i32
  }
  func.func @transform_4(%arg0: i32, %arg1: i32) -> (i32, i32) {
    %c0_i32 = arith.constant 0 : i32
    %c0_i32_0 = arith.constant 0 : i32
    %c0_i32_1 = arith.constant 0 : i32
    return %c0_i32, %c0_i32_0 : i32, i32
  }
  func.func @transform_5(%arg0: i32, %arg1: i32) -> (i32, i32) {
    %c0_i32 = arith.constant 0 : i32
    %c0_i32_0 = arith.constant 0 : i32
    return %arg0, %c0_i32 : i32, i32
  }
}

</mosaic_0001>

<llo_original>
// kernel: tpu_custom_call.1
$region0: #{tpu_custom_call.1}
  #allocation0 [shape = 'u32[]', space=smem, size = 0x4, offset = 0x4, fixed_abs, tag = 'smem constant byte address 0x4 - core index']
  #allocation1 [shape = 'u32[144,128]{1,0:T(1,128)}', space=vmem, size = 0x12000, scoped, tag = 'internal scratch']
  %s0 = inlined_call_operand.hbm [shape: f32[16,128], index: 0, kind: input, shape index: {}]
  %s1 = inlined_call_operand.hbm [shape: f32[128,256], index: 1, kind: input, shape index: {}]
  %s2 = inlined_call_operand.vmem [shape: f32[1,256], index: 2, kind: input, shape index: {}]
  %s3 = inlined_call_operand.hbm [shape: f32[256,128], index: 3, kind: input, shape index: {}]
  %s4 = inlined_call_operand.vmem [shape: f32[1,128], index: 4, kind: input, shape index: {}]
  %s5 = inlined_call_operand.hbm [shape: f32[16,128], index: 5, kind: output, shape index: {}]
  %s6 = sld [smem:[#allocation0]]
  $region42: #{tpu_custom_call.1} parent=0
    _
  %s8 = ssub.s32 1, %s6
  %s9 = scalar_select 0, %s8, %s6
  $region1: #{tpu_custom_call.1} parent=0
    #allocation2 [shape = 'u8[8192]{0}', space=vmem, size = 0x2000, scoped, tag = 'input window, operand 0, single buffered']
    #allocation3 [shape = 's32[1]{0}', space=sflag, size = 0x4, scoped, tag = 'scoped memory for tpu_custom_call.1']
    #allocation4 [shape = 's32[1]{0}', space=sflag, size = 0x4, scoped, tag = 'scoped memory for tpu_custom_call.1']
    #allocation5 [shape = 'u8[131072]{0}', space=vmem, size = 0x20000, scoped, tag = 'input window, operand 1, single buffered']
    #allocation6 [shape = 's32[1]{0}', space=sflag, size = 0x4, scoped, tag = 'scoped memory for tpu_custom_call.1']
    #allocation7 [shape = 'u8[131072]{0}', space=vmem, size = 0x20000, scoped, tag = 'input window, operand 3, single buffered']
    #allocation8 [shape = 'u8[8192]{0}', space=vmem, size = 0x2000, scoped, tag = 'output window, operand 0, single buffered']
    %10 = vsyncpa [#allocation3], 0
    %11 = vsyncpa [#allocation6], 0
    %12 = vsyncpa [#allocation4], 0
    // Predicated region
    $region2: #{tpu_custom_call.1} parent=1 // pred_check
      _
    $region3: #{tpu_custom_call.1} parent=1 // pred_check_branch
      %14 = sbr.rel (0) target = $region5
    $region4: #{tpu_custom_call.1} parent=1 // pred_region
      %s16 = ssub.s32 256, 256
      %17 = vsyncadd [#allocation3], %s16
      %s18 = sshll.u32 [#allocation2], 4
      %s19 = int_to_ptr.vmem [resolvable:$true] %s18
      %24 = dma.hbm_to_vmem [thread:$0]  %s0, 256, %s19, [#allocation3], 128, 128, 8
    $region5: #{tpu_custom_call.1} parent=1 // pred_fallthru
      _
    // Predicated region
    $region6: #{tpu_custom_call.1} parent=1 // pred_check
      _
    $region7: #{tpu_custom_call.1} parent=1 // pred_check_branch
      %26 = sbr.rel (0) target = $region9
    $region8: #{tpu_custom_call.1} parent=1 // pred_region
      %s28 = ssub.s32 4096, 4096
      %29 = vsyncadd [#allocation6], %s28
      %s30 = sshll.u32 [#allocation5], 4
      %s31 = int_to_ptr.vmem [resolvable:$true] %s30
      %36 = dma.hbm_to_vmem [thread:$0]  %s1, 4096, %s31, [#allocation6], 256, 256, 16
    $region9: #{tpu_custom_call.1} parent=1 // pred_fallthru
      _
    // Predicated region
    $region10: #{tpu_custom_call.1} parent=1 // pred_check
      _
    $region11: #{tpu_custom_call.1} parent=1 // pred_check_branch
      %38 = sbr.rel (0) target = $region13
    $region12: #{tpu_custom_call.1} parent=1 // pred_region
      _
    $region13: #{tpu_custom_call.1} parent=1 // pred_fallthru
      _
    // Predicated region
    $region14: #{tpu_custom_call.1} parent=1 // pred_check
      _
    $region15: #{tpu_custom_call.1} parent=1 // pred_check_branch
      %40 = sbr.rel (0) target = $region17
    $region16: #{tpu_custom_call.1} parent=1 // pred_region
      %s42 = ssub.s32 4096, 4096
      %43 = vsyncadd [#allocation6], %s42
      %s44 = sshll.u32 [#allocation7], 4
      %s45 = int_to_ptr.vmem [resolvable:$true] %s44
      %50 = dma.hbm_to_vmem [thread:$0]  %s3, 4096, %s45, [#allocation6], 128, 128, 8
    $region17: #{tpu_custom_call.1} parent=1 // pred_fallthru
      _
    // Predicated region
    $region18: #{tpu_custom_call.1} parent=1 // pred_check
      _
    $region19: #{tpu_custom_call.1} parent=1 // pred_check_branch
      %52 = sbr.rel (0) target = $region21
    $region20: #{tpu_custom_call.1} parent=1 // pred_region
      _
    $region21: #{tpu_custom_call.1} parent=1 // pred_fallthru
      _
    // Predicated region
    $region22: #{tpu_custom_call.1} parent=1 // pred_check
      _
    $region23: #{tpu_custom_call.1} parent=1 // pred_check_branch
      %54 = sbr.rel (0) target = $region25
    $region24: #{tpu_custom_call.1} parent=1 // pred_region
      %55 = dma.done [#allocation3], 256
    $region25: #{tpu_custom_call.1} parent=1 // pred_fallthru
      _
    // Predicated region
    $region26: #{tpu_custom_call.1} parent=1 // pred_check
      _
    $region27: #{tpu_custom_call.1} parent=1 // pred_check_branch
      %57 = sbr.rel (0) target = $region29
    $region28: #{tpu_custom_call.1} parent=1 // pred_region
      %58 = dma.done [#allocation6], 4096
    $region29: #{tpu_custom_call.1} parent=1 // pred_fallthru
      _
    // Predicated region
    $region30: #{tpu_custom_call.1} parent=1 // pred_check
      _
    $region31: #{tpu_custom_call.1} parent=1 // pred_check_branch
      %60 = sbr.rel (0) target = $region33
    $region32: #{tpu_custom_call.1} parent=1 // pred_region
      %61 = dma.done [#allocation6], 4096
    $region33: #{tpu_custom_call.1} parent=1 // pred_fallthru
      _
    %v62 = vld [vmem:[#allocation2] sm:$0xff]
    %v63 = vld [vmem:[#allocation2 + $0x8] sm:$0xff]
    %v64 = vld [vmem:[#allocation5] sm:$0xff]
    %v65 = vld [vmem:[#allocation5 + $0x8] sm:$0xff]
    %v66 = vld [vmem:[#allocation5 + $0x10] sm:$0xff]
    %v67 = vld [vmem:[#allocation5 + $0x18] sm:$0xff]
    %v68 = vld [vmem:[#allocation5 + $0x20] sm:$0xff]
    %v69 = vld [vmem:[#allocation5 + $0x28] sm:$0xff]
    %v70 = vld [vmem:[#allocation5 + $0x30] sm:$0xff]
    %v71 = vld [vmem:[#allocation5 + $0x38] sm:$0xff]
    %v72 = vld [vmem:[#allocation5 + $0x40] sm:$0xff]
    %v73 = vld [vmem:[#allocation5 + $0x48] sm:$0xff]
    %v74 = vld [vmem:[#allocation5 + $0x50] sm:$0xff]
    %v75 = vld [vmem:[#allocation5 + $0x58] sm:$0xff]
    %v76 = vld [vmem:[#allocation5 + $0x60] sm:$0xff]
    %v77 = vld [vmem:[#allocation5 + $0x68] sm:$0xff]
    %v78 = vld [vmem:[#allocation5 + $0x70] sm:$0xff]
    %v79 = vld [vmem:[#allocation5 + $0x78] sm:$0xff]
    %v80 = vld [vmem:[#allocation5 + $0x80] sm:$0xff]
    %v81 = vld [vmem:[#allocation5 + $0x88] sm:$0xff]
    %v82 = vld [vmem:[#allocation5 + $0x90] sm:$0xff]
    %v83 = vld [vmem:[#allocation5 + $0x98] sm:$0xff]
    %v84 = vld [vmem:[#allocation5 + $0xa0] sm:$0xff]
    %v85 = vld [vmem:[#allocation5 + $0xa8] sm:$0xff]
    %v86 = vld [vmem:[#allocation5 + $0xb0] sm:$0xff]
    %v87 = vld [vmem:[#allocation5 + $0xb8] sm:$0xff]
    %v88 = vld [vmem:[#allocation5 + $0xc0] sm:$0xff]
    %v89 = vld [vmem:[#allocation5 + $0xc8] sm:$0xff]
    %v90 = vld [vmem:[#allocation5 + $0xd0] sm:$0xff]
    %v91 = vld [vmem:[#allocation5 + $0xd8] sm:$0xff]
    %v92 = vld [vmem:[#allocation5 + $0xe0] sm:$0xff]
    %v93 = vld [vmem:[#allocation5 + $0xe8] sm:$0xff]
    %v94 = vld [vmem:[#allocation5 + $0xf0] sm:$0xff]
    %v95 = vld [vmem:[#allocation5 + $0xf8] sm:$0xff]
    %v96 = vld [vmem:[%s2] sm:$0x3]
    %v97 = vld [vmem:[#allocation7] sm:$0xff]
    %v98 = vld [vmem:[#allocation7 + $0x8] sm:$0xff]
    %v99 = vld [vmem:[#allocation7 + $0x10] sm:$0xff]
    %v100 = vld [vmem:[#allocation7 + $0x18] sm:$0xff]
    %v101 = vld [vmem:[#allocation7 + $0x20] sm:$0xff]
    %v102 = vld [vmem:[#allocation7 + $0x28] sm:$0xff]
    %v103 = vld [vmem:[#allocation7 + $0x30] sm:$0xff]
    %v104 = vld [vmem:[#allocation7 + $0x38] sm:$0xff]
    %v105 = vld [vmem:[#allocation7 + $0x40] sm:$0xff]
    %v106 = vld [vmem:[#allocation7 + $0x48] sm:$0xff]
    %v107 = vld [vmem:[#allocation7 + $0x50] sm:$0xff]
    %v108 = vld [vmem:[#allocation7 + $0x58] sm:$0xff]
    %v109 = vld [vmem:[#allocation7 + $0x60] sm:$0xff]
    %v110 = vld [vmem:[#allocation7 + $0x68] sm:$0xff]
    %v111 = vld [vmem:[#allocation7 + $0x70] sm:$0xff]
    %v112 = vld [vmem:[#allocation7 + $0x78] sm:$0xff]
    %v113 = vld [vmem:[#allocation7 + $0x80] sm:$0xff]
    %v114 = vld [vmem:[#allocation7 + $0x88] sm:$0xff]
    %v115 = vld [vmem:[#allocation7 + $0x90] sm:$0xff]
    %v116 = vld [vmem:[#allocation7 + $0x98] sm:$0xff]
    %v117 = vld [vmem:[#allocation7 + $0xa0] sm:$0xff]
    %v118 = vld [vmem:[#allocation7 + $0xa8] sm:$0xff]
    %v119 = vld [vmem:[#allocation7 + $0xb0] sm:$0xff]
    %v120 = vld [vmem:[#allocation7 + $0xb8] sm:$0xff]
    %v121 = vld [vmem:[#allocation7 + $0xc0] sm:$0xff]
    %v122 = vld [vmem:[#allocation7 + $0xc8] sm:$0xff]
    %v123 = vld [vmem:[#allocation7 + $0xd0] sm:$0xff]
    %v124 = vld [vmem:[#allocation7 + $0xd8] sm:$0xff]
    %v125 = vld [vmem:[#allocation7 + $0xe0] sm:$0xff]
    %v126 = vld [vmem:[#allocation7 + $0xe8] sm:$0xff]
    %v127 = vld [vmem:[#allocation7 + $0xf0] sm:$0xff]
    %v128 = vld [vmem:[#allocation7 + $0xf8] sm:$0xff]
    %v130 = vlaneseq
    %v131 = vshrl.u32 %v130, 7
    %v132 = vsub.s32 0, %v131
    %v133 = vrot.slane %v96, %v132
    %v134 = vlaneseq
    %v135 = vshrl.u32 %v134, 7
    %v136 = vsub.s32 1, %v135
    %v137 = vrot.slane %v96, %v136
    %140 = vmatprep.subr.mxu0 %v65
    %141 = vmatpush1.msra.mxu0 %v64
    %142 = vmatprep.subr.mxu0 %v67
    %143 = vmatpush1.msra.mxu0 %v66
    %144 = vmatprep.subr.mxu0 %v69
    %145 = vmatpush1.msra.mxu0 %v68
    %146 = vmatprep.subr.mxu0 %v71
    %147 = vmatpush1.msra.mxu0 %v70
    %148 = vmatprep.subr.mxu0 %v73
    %149 = vmatpush1.msra.mxu0 %v72
    %150 = vmatprep.subr.mxu0 %v75
    %151 = vmatpush1.msra.mxu0 %v74
    %152 = vmatprep.subr.mxu0 %v77
    %153 = vmatpush1.msra.mxu0 %v76
    %154 = vmatprep.subr.mxu0 %v79
    %155 = vmatpush1.msra.mxu0 %v78
    %156 = vmatprep.subr.mxu0 %v81
    %157 = vmatpush1.msra.mxu0 %v80
    %158 = vmatprep.subr.mxu0 %v83
    %159 = vmatpush1.msra.mxu0 %v82
    %160 = vmatprep.subr.mxu0 %v85
    %161 = vmatpush1.msra.mxu0 %v84
    %162 = vmatprep.subr.mxu0 %v87
    %163 = vmatpush1.msra.mxu0 %v86
    %164 = vmatprep.subr.mxu0 %v89
    %165 = vmatpush1.msra.mxu0 %v88
    %166 = vmatprep.subr.mxu0 %v91
    %167 = vmatpush1.msra.mxu0 %v90
    %168 = vmatprep.subr.mxu0 %v93
    %169 = vmatpush1.msra.mxu0 %v92
    %170 = vmatprep.subr.mxu0 %v95
    %171 = vmatpush1.msra.mxu0 %v94
    %172 = vmatprep.subr.mxu0 0.0
    %173 = vmatpush1.msra.mxu0 0.0
    %174 = vmatprep.subr.mxu0 0.0
    %175 = vmatpush1.msra.mxu0 0.0
    %176 = vmatprep.subr.mxu0 0.0
    %177 = vmatpush1.msra.mxu0 0.0
    %178 = vmatprep.subr.mxu0 0.0
    %179 = vmatpush1.msra.mxu0 0.0
    %180 = vmatprep.subr.mxu0 0.0
    %181 = vmatpush1.msra.mxu0 0.0
    %182 = vmatprep.subr.mxu0 0.0
    %183 = vmatpush1.msra.mxu0 0.0
    %184 = vmatprep.subr.mxu0 0.0
    %185 = vmatpush1.msra.mxu0 0.0
    %186 = vmatprep.subr.mxu0 0.0
    %187 = vmatpush1.msra.mxu0 0.0
    %188 = vmatprep.subr.mxu0 0.0
    %189 = vmatpush1.msra.mxu0 0.0
    %190 = vmatprep.subr.mxu0 0.0
    %191 = vmatpush1.msra.mxu0 0.0
    %192 = vmatprep.subr.mxu0 0.0
    %193 = vmatpush1.msra.mxu0 0.0
    %194 = vmatprep.subr.mxu0 0.0
    %195 = vmatpush1.msra.mxu0 0.0
    %196 = vmatprep.subr.mxu0 0.0
    %197 = vmatpush1.msra.mxu0 0.0
    %198 = vmatprep.subr.mxu0 0.0
    %199 = vmatpush1.msra.mxu0 0.0
    %200 = vmatprep.subr.mxu0 0.0
    %201 = vmatpush1.msra.mxu0 0.0
    %202 = vmatprep.subr.mxu0 0.0
    %203 = vmatpush1.msra.mxu0 0.0
    %204 = vmatprep.mubr.f32.mxu0 0.0
    %205 = vmatmul.mubr.f32.gmra.mrb[0].mxu0 %v62
    %v206 = vpop.f32.mrb[0].mxu0
    %v207 = vadd.f32 %v133, %v206
    %v208 = vpop.f32.mrb[0].mxu0
    %v209 = vadd.f32 %v137, %v208
    %210 = vmatprep.mubr.f32.mxu0 0.0
    %211 = vmatmul.mubr.f32.gmra.mrb[0].mxu0 %v63
    %v212 = vpop.f32.mrb[0].mxu0
    %v213 = vadd.f32 %v133, %v212
    %v214 = vpop.f32.mrb[0].mxu0
    %v215 = vadd.f32 %v137, %v214
    %216 = vdwg.mxu0
    %v217 = vmul.f32 %v207, 0.5
    %v218 = vmul.f32 %v209, 0.5
    %v219 = vmul.f32 %v213, 0.5
    %v220 = vmul.f32 %v215, 0.5
    %v221 = vmul.f32 %v207, 0.70710677
    %v222 = vmul.f32 %v209, 0.70710677
    %v223 = vmul.f32 %v213, 0.70710677
    %v224 = vmul.f32 %v215, 0.70710677
    %v225 = verf.f32.pop %v221
    %v226 = verf.f32.pop %v222
    %v227 = verf.f32.pop %v223
    %v228 = verf.f32.pop %v224
    %v229 = vadd.f32 %v225, 1.0
    %v230 = vadd.f32 %v226, 1.0
    %v231 = vadd.f32 %v227, 1.0
    %v232 = vadd.f32 %v228, 1.0
    %v233 = vmul.f32 %v217, %v229
    %v234 = vmul.f32 %v218, %v230
    %v235 = vmul.f32 %v219, %v231
    %v236 = vmul.f32 %v220, %v232
    %v237 = vld [vmem:[%s4] sm:$0x1]
    %v239 = vlaneseq
    %v240 = vshrl.u32 %v239, 7
    %v241 = vsub.s32 0, %v240
    %v242 = vrot.slane %v237, %v241
    %244 = vmatprep.subr.mxu0 0.0
    %245 = vmatpush1.msra.mxu0 %v97
    %246 = vmatprep.subr.mxu0 0.0
    %247 = vmatpush1.msra.mxu0 %v98
    %248 = vmatprep.subr.mxu0 0.0
    %249 = vmatpush1.msra.mxu0 %v99
    %250 = vmatprep.subr.mxu0 0.0
    %251 = vmatpush1.msra.mxu0 %v100
    %252 = vmatprep.subr.mxu0 0.0
    %253 = vmatpush1.msra.mxu0 %v101
    %254 = vmatprep.subr.mxu0 0.0
    %255 = vmatpush1.msra.mxu0 %v102
    %256 = vmatprep.subr.mxu0 0.0
    %257 = vmatpush1.msra.mxu0 %v103
    %258 = vmatprep.subr.mxu0 0.0
    %259 = vmatpush1.msra.mxu0 %v104
    %260 = vmatprep.subr.mxu0 0.0
    %261 = vmatpush1.msra.mxu0 %v105
    %262 = vmatprep.subr.mxu0 0.0
    %263 = vmatpush1.msra.mxu0 %v106
    %264 = vmatprep.subr.mxu0 0.0
    %265 = vmatpush1.msra.mxu0 %v107
    %266 = vmatprep.subr.mxu0 0.0
    %267 = vmatpush1.msra.mxu0 %v108
    %268 = vmatprep.subr.mxu0 0.0
    %269 = vmatpush1.msra.mxu0 %v109
    %270 = vmatprep.subr.mxu0 0.0
    %271 = vmatpush1.msra.mxu0 %v110
    %272 = vmatprep.subr.mxu0 0.0
    %273 = vmatpush1.msra.mxu0 %v111
    %274 = vmatprep.subr.mxu0 0.0
    %275 = vmatpush1.msra.mxu0 %v112
    %276 = vmatprep.subr.mxu0 0.0
    %277 = vmatpush1.msra.mxu0 %v113
    %278 = vmatprep.subr.mxu0 0.0
    %279 = vmatpush1.msra.mxu0 %v114
    %280 = vmatprep.subr.mxu0 0.0
    %281 = vmatpush1.msra.mxu0 %v115
    %282 = vmatprep.subr.mxu0 0.0
    %283 = vmatpush1.msra.mxu0 %v116
    %284 = vmatprep.subr.mxu0 0.0
    %285 = vmatpush1.msra.mxu0 %v117
    %286 = vmatprep.subr.mxu0 0.0
    %287 = vmatpush1.msra.mxu0 %v118
    %288 = vmatprep.subr.mxu0 0.0
    %289 = vmatpush1.msra.mxu0 %v119
    %290 = vmatprep.subr.mxu0 0.0
    %291 = vmatpush1.msra.mxu0 %v120
    %292 = vmatprep.subr.mxu0 0.0
    %293 = vmatpush1.msra.mxu0 %v121
    %294 = vmatprep.subr.mxu0 0.0
    %295 = vmatpush1.msra.mxu0 %v122
    %296 = vmatprep.subr.mxu0 0.0
    %297 = vmatpush1.msra.mxu0 %v123
    %298 = vmatprep.subr.mxu0 0.0
    %299 = vmatpush1.msra.mxu0 %v124
    %300 = vmatprep.subr.mxu0 0.0
    %301 = vmatpush1.msra.mxu0 %v125
    %302 = vmatprep.subr.mxu0 0.0
    %303 = vmatpush1.msra.mxu0 %v126
    %304 = vmatprep.subr.mxu0 0.0
    %305 = vmatpush1.msra.mxu0 %v127
    %306 = vmatprep.subr.mxu0 0.0
    %307 = vmatpush1.msra.mxu0 %v128
    %308 = vmatprep.mubr.f32.mxu0 %v234
    %309 = vmatmul.mubr.f32.gmra.mrb[0].mxu0 %v233
    %v310 = vpop.f32.mrb[0].mxu0
    %v311 = vadd.f32 %v242, %v310
    %v312 = vpop.f32.mrb[0].mxu0
    %313 = vmatprep.mubr.f32.mxu0 %v236
    %314 = vmatmul.mubr.f32.gmra.mrb[0].mxu0 %v235
    %v315 = vpop.f32.mrb[0].mxu0
    %v316 = vadd.f32 %v242, %v315
    %v317 = vpop.f32.mrb[0].mxu0
    %318 = vdwg.mxu0
    %319 = vst [vmem:[#allocation8] sm:$0xff] %v311
    %320 = vst [vmem:[#allocation8 + $0x8] sm:$0xff] %v316
    // Predicated region
    $region34: #{tpu_custom_call.1} parent=1 // pred_check
      _
    $region35: #{tpu_custom_call.1} parent=1 // pred_check_branch
      %322 = sbr.rel (0) target = $region37
    $region36: #{tpu_custom_call.1} parent=1 // pred_region
      %s324 = ssub.s32 256, 256
      %325 = vsyncadd [#allocation4], %s324
      %s326 = sshll.u32 [#allocation8], 4
      %s327 = int_to_ptr.vmem [resolvable:$true] %s326
      %332 = dma.vmem_to_hbm [thread:$0]  %s327, 256, %s5, [#allocation4], 128, 128, 8
    $region37: #{tpu_custom_call.1} parent=1 // pred_fallthru
      _
    // Predicated region
    $region38: #{tpu_custom_call.1} parent=1 // pred_check
      _
    $region39: #{tpu_custom_call.1} parent=1 // pred_check_branch
      %334 = sbr.rel (0) target = $region41
    $region40: #{tpu_custom_call.1} parent=1 // pred_region
      %335 = dma.done [#allocation4], 256
    $region41: #{tpu_custom_call.1} parent=1 // pred_fallthru
      _
    %336 = vsyncpa [#allocation3], 1
    %337 = vsyncpa [#allocation6], 1
    %338 = vsyncpa [#allocation4], 1

</llo_original>
